<compile_context>
chip_gen: v5e
topology: v5e:2x2
jax: 0.10.0
libtpu: 0.0.40
codegen_flags: <defaults>
</compile_context>

<pallas_src>
import math

import jax
import jax.numpy as jnp
from jax.experimental import pallas as pl
from jax.experimental.pallas import tpu as pltpu


def _gelu_tanh(x):
    # tanh approximation of GELU (tanh rides the EUP slot on TPU).
    c = math.sqrt(2.0 / math.pi)
    return 0.5 * x * (1.0 + jnp.tanh(c * (x + 0.044715 * x * x * x)))


def _round_up(x, m):
    return ((x + m - 1) // m) * m


# ---------------------------------------------------------------------------
# Fused MLP kernel (hidden axis optionally tiled as grid axis 1):
#   acc += gelu(x @ W1[:, kh] + b1[kh]) @ W2[kh, :]
#   y    = acc + b2                     (dropout = eval-mode identity)
# ---------------------------------------------------------------------------
def _ffn_kernel(x_ref, w1_ref, b1_ref, w2_ref, b2_ref, o_ref, acc_ref):
    # x_ref : (tm, dim)      row tile of flattened tokens
    # w1_ref: (dim, th)      fc1 weight chunk      b1_ref: (1, th)
    # w2_ref: (th, out_p)    fc2 weight chunk      b2_ref: (1, out_p)
    # o_ref : (tm, out_p)    acc_ref: (tm, out_p) f32 scratch
    k = pl.program_id(1)

    @pl.when(k == 0)
    def _():
        acc_ref[...] = jnp.zeros_like(acc_ref)

    # default MXU precision (bf16 passes when given bf16), f32 accumulation
    h = jnp.dot(x_ref[...], w1_ref[...], preferred_element_type=jnp.float32)
    h = _gelu_tanh(h + b1_ref[...])
    # TODO(synk): training-mode dropout not implemented (eval mode => identity).
    acc_ref[...] += jnp.dot(h.astype(w2_ref.dtype), w2_ref[...],
                            preferred_element_type=jnp.float32)

    @pl.when(k == pl.num_programs(1) - 1)
    def _():
        o_ref[...] = (acc_ref[...] + b2_ref[...]).astype(o_ref.dtype)


def _choose_tiles(M, dim, hidden, out_p, bpe_x, bpe_w, budget, block_rows):
    """Pick (row tile tm, hidden tile th, n_hidden_steps) fitting the VMEM budget."""
    if M > 256:
        # >= 2 row steps (v7x megacore can shard "parallel" axis), MXU-aligned.
        half = max(128, (pl.cdiv(M, 2) // 128) * 128)
        tm = min(block_rows, half)
    else:
        # single ragged-or-exact block; sublane aligned (covers bf16 packing too).
        tm = _round_up(M, 8)

    def footprint(tm_, th_, n_hid_):
        wbuf = 1 if n_hid_ == 1 else 2            # Buffered(1) when weights constant
        return (2 * tm_ * dim * bpe_x             # x     (double buffered)
                + 2 * tm_ * out_p * bpe_x         # out   (double buffered)
                + wbuf * (dim + 1) * th_ * bpe_w  # w1 + b1 blocks
                + wbuf * th_ * out_p * bpe_w      # w2 block
                + out_p * bpe_w                   # b2    (single buffered)
                + tm_ * out_p * 4                 # f32 accumulator scratch
                + 2 * tm_ * th_ * 4)              # f32 hidden activation headroom

    th, n_hid = hidden, 1
    if footprint(tm, th, 1) > budget:
        # hidden-tiled path: stream W1[:, kh] / W2[kh, :] chunks.
        th = _round_up(hidden, 128)
        while th > 128 and footprint(tm, th, 2) > budget:
            th = max(128, ((th // 2) // 128) * 128)
        while tm > 8 and footprint(tm, th, 2) > budget:
            tm = max(8, _round_up(tm // 2, 8))
        n_hid = _round_up(hidden, th) // th
        if n_hid == 1:
            th = hidden  # fits after shrinking tm; keep full-extent hidden block

    return tm, th, n_hid, footprint(tm, th, n_hid)


def feed_forward(x, w1, b1, w2, b2, *, block_rows=512):
    """FeedForward forward pass.

    x : (..., dim)
    w1: (dim, hidden)     b1: (hidden,)
    w2: (hidden, out_dim) b2: (out_dim,)
    returns (..., out_dim)

    Kernel is dtype-agnostic: pass bf16 activations/weights to halve DMA bytes
    and hit the bf16-native MXU path on v6e/v7x (f32 accumulation either way).
    """
    *lead, dim = x.shape
    hidden = w1.shape[1]
    out_dim = w2.shape[1]
    M = math.prod(lead) if lead else 1

    x2 = x.reshape(M, dim)
    b1r = b1.reshape(1, hidden)

    # Lane-dense output: pad the out lane dim to a multiple of 128 (zero columns
    # contribute nothing and are sliced off afterwards). No-op for typical dims.
    out_p = out_dim if out_dim % 128 == 0 else _round_up(out_dim, 128)
    if out_p != out_dim:
        w2 = jnp.pad(w2, ((0, 0), (0, out_p - out_dim)))
        b2 = jnp.pad(b2, (0, out_p - out_dim))
    b2r = b2.reshape(1, out_p)

    # VMEM budget: 75% of physical (≈48 MiB on v7x, ≈96 MiB on v5e/v6e).
    try:
        vmem_cap = int(pltpu.get_tpu_info().vmem_capacity_bytes)
    except Exception:
        vmem_cap = 64 * 1024 * 1024  # conservative (v7x-sized) fallback
    budget = max(32 * 1024 * 1024, (vmem_cap * 3) // 4)

    bpe_x = x2.dtype.itemsize
    bpe_w = w1.dtype.itemsize
    tm, th, n_hid, fp = _choose_tiles(M, dim, hidden, out_p, bpe_x, bpe_w,
                                      budget, block_rows)

    # When the hidden axis is tiled, pad hidden (zero weight cols / rows: gelu(0)=0,
    # zero rows of W2 => zero contribution) so th divides it exactly — a ragged
    # reduction block would otherwise read garbage into the accumulator.
    h_pad = th * n_hid
    if h_pad != hidden:
        w1 = jnp.pad(w1, ((0, 0), (0, h_pad - hidden)))
        b1r = jnp.pad(b1r, ((0, 0), (0, h_pad - hidden)))
        w2 = jnp.pad(w2, ((0, h_pad - hidden), (0, 0)))

    grid = (pl.cdiv(M, tm), n_hid)

    # Weight/bias blocks that never change across the grid get a single buffer.
    wmode = pl.Buffered(1) if n_hid == 1 else None
    const_mode = pl.Buffered(1)

    vmem_limit = int(min(budget, max(fp + (8 << 20), 32 << 20)))

    cost = pl.CostEstimate(
        flops=2 * M * dim * hidden + 2 * M * hidden * out_p,
        transcendentals=M * hidden,
        bytes_accessed=(M * dim * bpe_x + M * out_p * bpe_x
                        + (dim * h_pad + h_pad) * bpe_w
                        + (h_pad * out_p + out_p) * bpe_w),
    )

    out = pl.pallas_call(
        _ffn_kernel,
        out_shape=jax.ShapeDtypeStruct((M, out_p), x.dtype),
        grid=grid,
        in_specs=[
            pl.BlockSpec((tm, dim), lambda i, k: (i, 0)),
            pl.BlockSpec((dim, th), lambda i, k: (0, k), pipeline_mode=wmode),
            pl.BlockSpec((1, th), lambda i, k: (0, k), pipeline_mode=wmode),
            pl.BlockSpec((th, out_p), lambda i, k: (k, 0), pipeline_mode=wmode),
            pl.BlockSpec((1, out_p), lambda i, k: (0, 0), pipeline_mode=const_mode),
        ],
        out_specs=pl.BlockSpec((tm, out_p), lambda i, k: (i, 0)),
        scratch_shapes=[pltpu.VMEM((tm, out_p), jnp.float32)],
        compiler_params=pltpu.CompilerParams(
            dimension_semantics=("parallel", "arbitrary"),
            vmem_limit_bytes=vmem_limit,
        ),
        cost_estimate=cost,
    )(x2, w1, b1r, w2, b2r)

    if out_p != out_dim:
        out = out[:, :out_dim]
    return out.reshape(*lead, out_dim)


# ---------------------------------------------------------------------------
# Pure-JAX reference (same numerics class: default precision, tanh GELU)
# ---------------------------------------------------------------------------
def ref_forward(x, w1, b1, w2, b2):
    h = _gelu_tanh(x @ w1 + b1)
    return h @ w2 + b2


if __name__ == "__main__":
    # Small shapes consistent with the module: batch=2, seq=16, dim=32, hidden=64.
    B, N, dim, hidden_dim = 2, 16, 32, 64
    out_dim = dim            # out_dim=None -> dim
    dropout = 0.1            # nn.Dropout: identity in eval mode

    key = jax.random.PRNGKey(0)
    kx, k1, k2, k3, k4 = jax.random.split(key, 5)

    x = jax.random.normal(kx, (B, N, dim), jnp.float32)

    # nn.Linear default init: U(-1/sqrt(fan_in), 1/sqrt(fan_in)) for weight and bias.
    lim1 = 1.0 / math.sqrt(dim)
    w1 = jax.random.uniform(k1, (dim, hidden_dim), jnp.float32, -lim1, lim1)
    b1 = jax.random.uniform(k2, (hidden_dim,), jnp.float32, -lim1, lim1)
    lim2 = 1.0 / math.sqrt(hidden_dim)
    w2 = jax.random.uniform(k3, (hidden_dim, out_dim), jnp.float32, -lim2, lim2)
    b2 = jax.random.uniform(k4, (out_dim,), jnp.float32, -lim2, lim2)

    out = jax.jit(feed_forward)(x, w1, b1, w2, b2)
    out = jax.block_until_ready(out)
    assert out.shape == (B, N, out_dim)

    ref = ref_forward(x, w1, b1, w2, b2)
    # default-precision MXU path on both sides -> small accumulation-order diffs only
    assert jnp.allclose(out, ref, atol=1e-2, rtol=1e-2), \
        float(jnp.max(jnp.abs(out - ref)))

    print("KERNEL_OK")
</pallas_src>

<mosaic_0001>
module attributes {stable_mosaic.version = 11 : i64} {
  func.func @_ffn_kernel(%arg0: i32, %arg1: i32, %arg2: memref<32x32xf32, #tpu.memory_space<vmem>>, %arg3: memref<32x64xf32, #tpu.memory_space<vmem>>, %arg4: memref<1x64xf32, #tpu.memory_space<vmem>>, %arg5: memref<64x128xf32, #tpu.memory_space<vmem>>, %arg6: memref<1x128xf32, #tpu.memory_space<vmem>>, %arg7: memref<32x128xf32, #tpu.memory_space<vmem>>, %arg8: memref<32x128xf32, #tpu.memory_space<vmem>>) attributes {dimension_semantics = [#tpu.dimension_semantics<parallel>, #tpu.dimension_semantics<arbitrary>], iteration_bounds = array<i64: 1, 1>, scalar_prefetch = 0 : i64, scratch_operands = 1 : i64, tpu.core_type = #tpu.core_type<tc>, window_params = [{transform_indices = @transform_0, window_bounds = array<i64: 32, 32>}, {pipeline_mode = #tpu.pipeline_mode<synchronous>, transform_indices = @transform_1, window_bounds = array<i64: 32, 64>}, {pipeline_mode = #tpu.pipeline_mode<synchronous>, transform_indices = @transform_2, window_bounds = array<i64: 1, 64>}, {pipeline_mode = #tpu.pipeline_mode<synchronous>, transform_indices = @transform_3, window_bounds = array<i64: 64, 128>}, {pipeline_mode = #tpu.pipeline_mode<synchronous>, transform_indices = @transform_4, window_bounds = array<i64: 1, 128>}, {transform_indices = @transform_5, window_bounds = array<i64: 32, 128>}]} {
    %c0_i32 = arith.constant 0 : i32
    %0 = arith.cmpi eq, %arg1, %c0_i32 : i32
    %1 = arith.extui %0 : i1 to i32
    %c0_i32_0 = arith.constant 0 : i32
    %2 = arith.cmpi ne, %1, %c0_i32_0 : i32
    scf.if %2 {
      %cst_19 = arith.constant 0.000000e+00 : f32
      %30 = vector.broadcast %cst_19 : f32 to vector<32x128xf32>
      %c0_20 = arith.constant 0 : index
      %c0_21 = arith.constant 0 : index
      %31 = vector.load %arg8[%c0_20, %c0_21] : memref<32x128xf32, #tpu.memory_space<vmem>>, vector<32x128xf32>
      tpu.vector_store %arg8[%c0_20, %c0_21], %30 {strides = array<i32>} : memref<32x128xf32, #tpu.memory_space<vmem>>, vector<32x128xf32>,
    } else {
    }
    %c0 = arith.constant 0 : index
    %c0_1 = arith.constant 0 : index
    %3 = vector.load %arg2[%c0, %c0_1] : memref<32x32xf32, #tpu.memory_space<vmem>>, vector<32x32xf32>
    %c0_2 = arith.constant 0 : index
    %c0_3 = arith.constant 0 : index
    %4 = vector.load %arg3[%c0_2, %c0_3] : memref<32x64xf32, #tpu.memory_space<vmem>>, vector<32x64xf32>
    %cst = arith.constant dense<0.000000e+00> : vector<32x64xf32>
    %5 = tpu.matmul %3, %4, %cst {dimension_numbers = #tpu.dot_dimension_numbers<[1], [0], [0], [1], [0, 0, 1, 1], [], []>} : vector<32x32xf32>, vector<32x64xf32>, vector<32x64xf32> -> vector<32x64xf32>
    %c0_4 = arith.constant 0 : index
    %c0_5 = arith.constant 0 : index
    %6 = vector.load %arg4[%c0_4, %c0_5] : memref<1x64xf32, #tpu.memory_space<vmem>>, vector<1x64xf32>
    %7 = vector.broadcast %6 : vector<1x64xf32> to vector<32x64xf32>
    %8 = arith.addf %5, %7 : vector<32x64xf32>
    %cst_6 = arith.constant 5.000000e-01 : f32
    %9 = vector.broadcast %cst_6 : f32 to vector<32x64xf32>
    %10 = arith.mulf %9, %8 : vector<32x64xf32>
    %cst_7 = arith.constant 4.471500e-02 : f32
    %11 = vector.broadcast %cst_7 : f32 to vector<32x64xf32>
    %12 = arith.mulf %11, %8 : vector<32x64xf32>
    %13 = arith.mulf %12, %8 : vector<32x64xf32>
    %14 = arith.mulf %13, %8 : vector<32x64xf32>
    %15 = arith.addf %8, %14 : vector<32x64xf32>
    %cst_8 = arith.constant 0.797884583 : f32
    %16 = vector.broadcast %cst_8 : f32 to vector<32x64xf32>
    %17 = arith.mulf %16, %15 : vector<32x64xf32>
    %18 = math.tanh %17 : vector<32x64xf32>
    %cst_9 = arith.constant 1.000000e+00 : f32
    %19 = vector.broadcast %cst_9 : f32 to vector<32x64xf32>
    %20 = arith.addf %19, %18 : vector<32x64xf32>
    %21 = arith.mulf %10, %20 : vector<32x64xf32>
    %c0_10 = arith.constant 0 : index
    %c0_11 = arith.constant 0 : index
    %22 = vector.load %arg8[%c0_10, %c0_11] : memref<32x128xf32, #tpu.memory_space<vmem>>, vector<32x128xf32>
    %c0_12 = arith.constant 0 : index
    %c0_13 = arith.constant 0 : index
    %23 = vector.load %arg5[%c0_12, %c0_13] : memref<64x128xf32, #tpu.memory_space<vmem>>, vector<64x128xf32>
    %cst_14 = arith.constant dense<0.000000e+00> : vector<32x128xf32>
    %24 = tpu.matmul %21, %23, %cst_14 {dimension_numbers = #tpu.dot_dimension_numbers<[1], [0], [0], [1], [0, 0, 1, 1], [], []>} : vector<32x64xf32>, vector<64x128xf32>, vector<32x128xf32> -> vector<32x128xf32>
    %25 = arith.addf %22, %24 : vector<32x128xf32>
    %c0_15 = arith.constant 0 : index
    %c0_16 = arith.constant 0 : index
    %26 = vector.load %arg8[%c0_15, %c0_16] : memref<32x128xf32, #tpu.memory_space<vmem>>, vector<32x128xf32>
    tpu.vector_store %arg8[%c0_15, %c0_16], %25 {strides = array<i32>} : memref<32x128xf32, #tpu.memory_space<vmem>>, vector<32x128xf32>,
    %c0_i32_17 = arith.constant 0 : i32
    %27 = arith.cmpi eq, %arg1, %c0_i32_17 : i32
    %28 = arith.extui %27 : i1 to i32
    %c0_i32_18 = arith.constant 0 : i32
    %29 = arith.cmpi ne, %28, %c0_i32_18 : i32
    scf.if %29 {
      %c0_19 = arith.constant 0 : index
      %c0_20 = arith.constant 0 : index
      %30 = vector.load %arg8[%c0_19, %c0_20] : memref<32x128xf32, #tpu.memory_space<vmem>>, vector<32x128xf32>
      %c0_21 = arith.constant 0 : index
      %c0_22 = arith.constant 0 : index
      %31 = vector.load %arg6[%c0_21, %c0_22] : memref<1x128xf32, #tpu.memory_space<vmem>>, vector<1x128xf32>
      %32 = vector.broadcast %31 : vector<1x128xf32> to vector<32x128xf32>
      %33 = arith.addf %30, %32 : vector<32x128xf32>
      %c0_23 = arith.constant 0 : index
      %c0_24 = arith.constant 0 : index
      %34 = vector.load %arg7[%c0_23, %c0_24] : memref<32x128xf32, #tpu.memory_space<vmem>>, vector<32x128xf32>
      tpu.vector_store %arg7[%c0_23, %c0_24], %33 {strides = array<i32>} : memref<32x128xf32, #tpu.memory_space<vmem>>, vector<32x128xf32>,
    } else {
    }
    return
  }
  func.func @transform_0(%arg0: i32, %arg1: i32) -> (i32, i32) {
    %c0_i32 = arith.constant 0 : i32
    %c0_i32_0 = arith.constant 0 : i32
    return %arg0, %c0_i32 : i32, i32
  }
  func.func @transform_1(%arg0: i32, %arg1: i32) -> (i32, i32) {
    %c0_i32 = arith.constant 0 : i32
    %c0_i32_0 = arith.constant 0 : i32
    return %c0_i32, %arg1 : i32, i32
  }
  func.func @transform_2(%arg0: i32, %arg1: i32) -> (i32, i32) {
    %c0_i32 = arith.constant 0 : i32
    %c0_i32_0 = arith.constant 0 : i32
    return %c0_i32, %arg1 : i32, i32
  }
  func.func @transform_3(%arg0: i32, %arg1: i32) -> (i32, i32) {
    %c0_i32 = arith.constant 0 : i32
    %c0_i32_0 = arith.constant 0 : i32
    return %arg1, %c0_i32 : i32, i32
  }
  func.func @transform_4(%arg0: i32, %arg1: i32) -> (i32, i32) {
    %c0_i32 = arith.constant 0 : i32
    %c0_i32_0 = arith.constant 0 : i32
    %c0_i32_1 = arith.constant 0 : i32
    return %c0_i32, %c0_i32_0 : i32, i32
  }
  func.func @transform_5(%arg0: i32, %arg1: i32) -> (i32, i32) {
    %c0_i32 = arith.constant 0 : i32
    %c0_i32_0 = arith.constant 0 : i32
    return %arg0, %c0_i32 : i32, i32
  }
}

</mosaic_0001>

<llo_original>
// kernel: feed_forward.1
$region0: #{feed_forward.1}
  #allocation0 [shape = 'u32[]', space=smem, size = 0x4, offset = 0x4, fixed_abs, tag = 'smem constant byte address 0x4 - core index']
  #allocation1 [shape = 'u32[72,128]{1,0:T(1,128)}', space=vmem, size = 0x9000, scoped, tag = 'internal scratch']
  #allocation2 [shape = 'f32[32,128]{1,0:T(8,128)}', space=vmem, size = 0x4000, scoped, tag = 'scratch operand']
  %s0 = inlined_call_operand.vmem [shape: f32[32,32], index: 0, kind: input, shape index: {}]
  %s1 = inlined_call_operand.vmem [shape: f32[32,64], index: 1, kind: input, shape index: {}]
  %s2 = inlined_call_operand.vmem [shape: f32[1,64], index: 2, kind: input, shape index: {}]
  %s3 = inlined_call_operand.vmem [shape: f32[64,128], index: 3, kind: input, shape index: {}]
  %s4 = inlined_call_operand.vmem [shape: f32[1,128], index: 4, kind: input, shape index: {}]
  %s5 = inlined_call_operand.hbm [shape: f32[32,128], index: 5, kind: output, shape index: {}]
  %s6 = sld [smem:[#allocation0]]
  $region38: #{feed_forward.1} parent=0
    _
  %s8 = ssub.s32 1, %s6
  %s9 = scalar_select 0, %s8, %s6
  $region1: #{feed_forward.1} parent=0
    #allocation3 [shape = 'u8[16384]{0}', space=vmem, size = 0x4000, scoped, tag = 'output window, operand 0, single buffered']
    #allocation4 [shape = 's32[1]{0}', space=sflag, size = 0x4, scoped, tag = 'scoped memory for feed_forward.1']
    %10 = vsyncpa [#allocation4], 0
    // Predicated region
    $region2: #{feed_forward.1} parent=1 // pred_check
      _
    $region3: #{feed_forward.1} parent=1 // pred_check_branch
      %12 = sbr.rel (0) target = $region5
    $region4: #{feed_forward.1} parent=1 // pred_region
      _
    $region5: #{feed_forward.1} parent=1 // pred_fallthru
      _
    // Predicated region
    $region6: #{feed_forward.1} parent=1 // pred_check
      _
    $region7: #{feed_forward.1} parent=1 // pred_check_branch
      %14 = sbr.rel (0) target = $region9
    $region8: #{feed_forward.1} parent=1 // pred_region
      _
    $region9: #{feed_forward.1} parent=1 // pred_fallthru
      _
    // Predicated region
    $region10: #{feed_forward.1} parent=1 // pred_check
      _
    $region11: #{feed_forward.1} parent=1 // pred_check_branch
      %16 = sbr.rel (0) target = $region13
    $region12: #{feed_forward.1} parent=1 // pred_region
      _
    $region13: #{feed_forward.1} parent=1 // pred_fallthru
      _
    // Predicated region
    $region14: #{feed_forward.1} parent=1 // pred_check
      _
    $region15: #{feed_forward.1} parent=1 // pred_check_branch
      %18 = sbr.rel (0) target = $region17
    $region16: #{feed_forward.1} parent=1 // pred_region
      _
    $region17: #{feed_forward.1} parent=1 // pred_fallthru
      _
    // Predicated region
    $region18: #{feed_forward.1} parent=1 // pred_check
      _
    $region19: #{feed_forward.1} parent=1 // pred_check_branch
      %20 = sbr.rel (0) target = $region21
    $region20: #{feed_forward.1} parent=1 // pred_region
      _
    $region21: #{feed_forward.1} parent=1 // pred_fallthru
      _
    %p21 = scmp.eq.s32.totalorder 0, 0
    // Predicated region
    $region22: #{feed_forward.1} parent=1 // pred_check
      %p22 = pneg %p21
    $region23: #{feed_forward.1} parent=1 // pred_check_branch
      %24 = sbr.rel (%p22) target = $region25
    $region24: #{feed_forward.1} parent=1 // pred_region
      %25 = vst [vmem:[#allocation2] sm:$0xff] 0.0
      %26 = vst [vmem:[#allocation2 + $0x8] sm:$0xff] 0.0
      %27 = vst [vmem:[#allocation2 + $0x10] sm:$0xff] 0.0
      %28 = vst [vmem:[#allocation2 + $0x18] sm:$0xff] 0.0
    $region25: #{feed_forward.1} parent=1 // pred_fallthru
      _
    %v29 = vld [vmem:[%s0] sm:$0xff]
    %v30 = vld [vmem:[%s0 + $0x8] sm:$0xff]
    %v31 = vld [vmem:[%s0 + $0x10] sm:$0xff]
    %v32 = vld [vmem:[%s0 + $0x18] sm:$0xff]
    %v33 = vld [vmem:[%s1] sm:$0xff]
    %v34 = vld [vmem:[%s1 + $0x8] sm:$0xff]
    %v35 = vld [vmem:[%s1 + $0x10] sm:$0xff]
    %v36 = vld [vmem:[%s1 + $0x18] sm:$0xff]
    %v37 = vld [vmem:[%s2] sm:$0x1]
    %v39 = vperm.slane %v37, 0
    %vm41 = vcmask 261120
    %v43 = vsel %vm41, %v29, 0
    %v46 = vsel %vm41, %v30, 0
    %v49 = vsel %vm41, %v31, 0
    %v52 = vsel %vm41, %v32, 0
    %54 = vmatpush.msra.mxu0 0.0
    %55 = vmatpush.msra.mxu0 0.0
    %56 = vmatpush.msra.mxu0 0.0
    %57 = vmatpush.msra.mxu0 0.0
    %58 = vmatpush.msra.mxu0 0.0
    %59 = vmatpush.msra.mxu0 0.0
    %60 = vmatpush.msra.mxu0 0.0
    %61 = vmatpush.msra.mxu0 0.0
    %62 = vmatpush.msra.mxu0 0.0
    %63 = vmatpush.msra.mxu0 0.0
    %64 = vmatpush.msra.mxu0 0.0
    %65 = vmatpush.msra.mxu0 0.0
    %66 = vmatpush.msra.mxu0 %v36
    %67 = vmatpush.msra.mxu0 %v35
    %68 = vmatpush.msra.mxu0 %v34
    %69 = vmatpush.msra.mxu0 %v33
    %70 = vmatmul.f32.gmra.mxu0 %v43
    %v71 = vpop.f32.mrf.mxu0
    %v72 = vadd.f32 %v39, %v71
    %73 = vmatmul.f32.gmra.mxu0 %v46
    %v74 = vpop.f32.mrf.mxu0
    %v75 = vadd.f32 %v39, %v74
    %76 = vmatmul.f32.gmra.mxu0 %v49
    %v77 = vpop.f32.mrf.mxu0
    %v78 = vadd.f32 %v39, %v77
    %79 = vmatmul.f32.gmra.mxu0 %v52
    %v80 = vpop.f32.mrf.mxu0
    %v81 = vadd.f32 %v39, %v80
    %82 = vdwg.mxu0
    %v83 = vmul.f32 %v72, 0.5
    %v84 = vmul.f32 %v75, 0.5
    %v85 = vmul.f32 %v78, 0.5
    %v86 = vmul.f32 %v81, 0.5
    %v87 = vmul.f32 %v72, 0.044715
    %v88 = vmul.f32 %v75, 0.044715
    %v89 = vmul.f32 %v78, 0.044715
    %v90 = vmul.f32 %v81, 0.044715
    %v91 = vmul.f32 %v87, %v72
    %v92 = vmul.f32 %v88, %v75
    %v93 = vmul.f32 %v89, %v78
    %v94 = vmul.f32 %v90, %v81
    %v95 = vmul.f32 %v91, %v72
    %v96 = vmul.f32 %v92, %v75
    %v97 = vmul.f32 %v93, %v78
    %v98 = vmul.f32 %v94, %v81
    %v99 = vadd.f32 %v72, %v95
    %v100 = vadd.f32 %v75, %v96
    %v101 = vadd.f32 %v78, %v97
    %v102 = vadd.f32 %v81, %v98
    %v103 = vmul.f32 %v99, 0.7978846
    %v104 = vmul.f32 %v100, 0.7978846
    %v105 = vmul.f32 %v101, 0.7978846
    %v106 = vmul.f32 %v102, 0.7978846
    %v107 = vtanh.pop %v103
    %v108 = vtanh.pop %v104
    %v109 = vtanh.pop %v105
    %v110 = vtanh.pop %v106
    %v111 = vadd.f32 %v107, 1.0
    %v112 = vadd.f32 %v108, 1.0
    %v113 = vadd.f32 %v109, 1.0
    %v114 = vadd.f32 %v110, 1.0
    %v115 = vmul.f32 %v83, %v111
    %v116 = vmul.f32 %v84, %v112
    %v117 = vmul.f32 %v85, %v113
    %v118 = vmul.f32 %v86, %v114
    %v119 = vld [vmem:[#allocation2] sm:$0xff]
    %v120 = vld [vmem:[#allocation2 + $0x8] sm:$0xff]
    %v121 = vld [vmem:[#allocation2 + $0x10] sm:$0xff]
    %v122 = vld [vmem:[#allocation2 + $0x18] sm:$0xff]
    %v123 = vld [vmem:[%s3] sm:$0xff]
    %v124 = vld [vmem:[%s3 + $0x8] sm:$0xff]
    %v125 = vld [vmem:[%s3 + $0x10] sm:$0xff]
    %v126 = vld [vmem:[%s3 + $0x18] sm:$0xff]
    %v127 = vld [vmem:[%s3 + $0x20] sm:$0xff]
    %v128 = vld [vmem:[%s3 + $0x28] sm:$0xff]
    %v129 = vld [vmem:[%s3 + $0x30] sm:$0xff]
    %v130 = vld [vmem:[%s3 + $0x38] sm:$0xff]
    %vm131 = vcmask 523264
    %v133 = vsel %vm131, %v115, 0
    %v136 = vsel %vm131, %v116, 0
    %v139 = vsel %vm131, %v117, 0
    %v142 = vsel %vm131, %v118, 0
    %144 = vmatpush.msra.mxu0 0.0
    %145 = vmatpush.msra.mxu0 0.0
    %146 = vmatpush.msra.mxu0 0.0
    %147 = vmatpush.msra.mxu0 0.0
    %148 = vmatpush.msra.mxu0 0.0
    %149 = vmatpush.msra.mxu0 0.0
    %150 = vmatpush.msra.mxu0 0.0
    %151 = vmatpush.msra.mxu0 0.0
    %152 = vmatpush.msra.mxu0 %v130
    %153 = vmatpush.msra.mxu0 %v129
    %154 = vmatpush.msra.mxu0 %v128
    %155 = vmatpush.msra.mxu0 %v127
    %156 = vmatpush.msra.mxu0 %v126
    %157 = vmatpush.msra.mxu0 %v125
    %158 = vmatpush.msra.mxu0 %v124
    %159 = vmatpush.msra.mxu0 %v123
    %160 = vmatmul.f32.gmra.mxu0 %v133
    %v161 = vpop.f32.mrf.mxu0
    %v162 = vadd.f32 0.0, %v161
    %163 = vmatmul.f32.gmra.mxu0 %v136
    %v164 = vpop.f32.mrf.mxu0
    %v165 = vadd.f32 0.0, %v164
    %166 = vmatmul.f32.gmra.mxu0 %v139
    %v167 = vpop.f32.mrf.mxu0
    %v168 = vadd.f32 0.0, %v167
    %169 = vmatmul.f32.gmra.mxu0 %v142
    %v170 = vpop.f32.mrf.mxu0
    %v171 = vadd.f32 0.0, %v170
    %172 = vdwg.mxu0
    %v173 = vadd.f32 %v119, %v162
    %v174 = vadd.f32 %v120, %v165
    %v175 = vadd.f32 %v121, %v168
    %v176 = vadd.f32 %v122, %v171
    %177 = vst [vmem:[#allocation2] sm:$0xff] %v173
    %178 = vst [vmem:[#allocation2 + $0x8] sm:$0xff] %v174
    %179 = vst [vmem:[#allocation2 + $0x10] sm:$0xff] %v175
    %180 = vst [vmem:[#allocation2 + $0x18] sm:$0xff] %v176
    // Predicated region
    $region26: #{feed_forward.1} parent=1 // pred_check
      %p181 = pneg %p21
    $region27: #{feed_forward.1} parent=1 // pred_check_branch
      %183 = sbr.rel (%p181) target = $region29
    $region28: #{feed_forward.1} parent=1 // pred_region
      %v184 = vld [vmem:[#allocation2] sm:$0xff]
      %v185 = vld [vmem:[#allocation2 + $0x8] sm:$0xff]
      %v186 = vld [vmem:[#allocation2 + $0x10] sm:$0xff]
      %v187 = vld [vmem:[#allocation2 + $0x18] sm:$0xff]
      %v188 = vld [vmem:[%s4] sm:$0x1]
      %v190 = vperm.slane %v188, 0
      %v192 = vadd.f32 %v184, %v190
      %v193 = vadd.f32 %v185, %v190
      %v194 = vadd.f32 %v186, %v190
      %v195 = vadd.f32 %v187, %v190
      %196 = vst [vmem:[#allocation3] sm:$0xff] %v192
      %197 = vst [vmem:[#allocation3 + $0x8] sm:$0xff] %v193
      %198 = vst [vmem:[#allocation3 + $0x10] sm:$0xff] %v194
      %199 = vst [vmem:[#allocation3 + $0x18] sm:$0xff] %v195
    $region29: #{feed_forward.1} parent=1 // pred_fallthru
      _
    // Predicated region
    $region30: #{feed_forward.1} parent=1 // pred_check
      _
    $region31: #{feed_forward.1} parent=1 // pred_check_branch
      %201 = sbr.rel (0) target = $region33
    $region32: #{feed_forward.1} parent=1 // pred_region
      %203 = vsyncadd [#allocation4], 0
      %s204 = sshll.u32 [#allocation3], 4
      %s205 = int_to_ptr.vmem [resolvable:$true] %s204
      %s206 = sshll.u32 %s5, 4
      %s207 = int_to_ptr.hbm [resolvable:$true] %s206
      %212 = dma.vmem_to_hbm [thread:$0]  %s205, 512, %s207, [#allocation4], 128, 128, 8
    $region33: #{feed_forward.1} parent=1 // pred_fallthru
      _
    // Predicated region
    $region34: #{feed_forward.1} parent=1 // pred_check
      _
    $region35: #{feed_forward.1} parent=1 // pred_check_branch
      %214 = sbr.rel (0) target = $region37
    $region36: #{feed_forward.1} parent=1 // pred_region
      %216 = dma.done [#allocation4], 512
    $region37: #{feed_forward.1} parent=1 // pred_fallthru
      _
    %217 = vsyncpa [#allocation4], 1

</llo_original>
